<compile_context>
chip_gen: v7x
topology: tpu7x:2x2x1
jax: 0.10.0
libtpu: 0.0.40
codegen_flags: <defaults>
</compile_context>

<pallas_src>
import jax
import jax.numpy as jnp
from jax import lax
from jax.experimental import pallas as pl
from jax.experimental.pallas import tpu as pltpu

_EPS = 1e-5  # PyTorch InstanceNorm1d default eps


def _instance_norm(h):
    # InstanceNorm1d (affine=False, track_running_stats=False): normalize each row
    # over the feature axis with biased variance. rsqrt lowers to the EUP slot.
    mean = jnp.mean(h, axis=-1, keepdims=True)
    centered = h - mean
    var = jnp.mean(centered * centered, axis=-1, keepdims=True)
    return centered * lax.rsqrt(var + _EPS)


def ins_res_block_kernel(x_ref, w1_ref, b1_ref, w2_ref, b2_ref, o_ref):
    # x_ref: (tm, N); w*_ref: (N, N) in PyTorch [out, in] layout; b*_ref: (1, N).
    x = x_ref[...]
    # Contract x's dim 1 with W's dim 1 (i.e. x @ W.T) without any transpose copy.
    dn = (((1,), (1,)), ((), ()))

    h = lax.dot_general(x, w1_ref[...], dimension_numbers=dn,
                        preferred_element_type=jnp.float32)
    h = h + b1_ref[...]
    h = _instance_norm(h)
    h = jnp.maximum(h, 0.0)                       # ReLU

    h = lax.dot_general(h, w2_ref[...], dimension_numbers=dn,
                        preferred_element_type=jnp.float32)
    h = h + b2_ref[...]
    h = _instance_norm(h)

    o_ref[...] = (h + x.astype(jnp.float32)).astype(o_ref.dtype)   # residual add


def ins_res_block(x, w1, b1, w2, b2, *, tm=256):
    """x: (B, N) f32; w1,w2: (N, N) f32 (PyTorch [out, in]); b1,b2: (N,) f32."""
    B, N = x.shape

    def round_up(a, m):
        return ((a + m - 1) // m) * m

    # Row-tile size: multiple of 8 (f32 sublane), no larger than the padded batch.
    tm = max(8, min(round_up(tm, 8), round_up(B, 8)))
    Bp = round_up(B, tm)
    x_in = jnp.pad(x, ((0, Bp - B), (0, 0))) if Bp != B else x
    b1_2d = b1.reshape(1, N)
    b2_2d = b2.reshape(1, N)

    grid = (Bp // tm,)

    # Advisory cost for XLA's scheduler.
    flops = 4 * Bp * N * N + 12 * Bp * N            # two matmuls + elementwise
    bytes_accessed = 4 * (2 * Bp * N + 2 * N * N + 2 * N)
    cost = pl.CostEstimate(flops=flops, transcendentals=2 * Bp,
                           bytes_accessed=bytes_accessed)

    # Rough double-buffered VMEM footprint; keep the scoped limit v7x-safe (<=64 MiB).
    vmem_bytes = 4 * (2 * 2 * tm * N + 2 * 2 * N * N + 2 * 2 * N + tm * N)
    vmem_limit = min(64 * 1024 * 1024, max(16 * 1024 * 1024, 2 * vmem_bytes))

    out = pl.pallas_call(
        ins_res_block_kernel,
        out_shape=jax.ShapeDtypeStruct((Bp, N), x.dtype),
        grid_spec=pltpu.PrefetchScalarGridSpec(
            num_scalar_prefetch=0,
            grid=grid,
            in_specs=[
                pl.BlockSpec((tm, N), lambda i: (i, 0)),   # x rows: streamed/pipelined
                pl.BlockSpec((N, N), lambda i: (0, 0)),    # W1: constant block -> fetched once
                pl.BlockSpec((1, N), lambda i: (0, 0)),    # b1
                pl.BlockSpec((N, N), lambda i: (0, 0)),    # W2
                pl.BlockSpec((1, N), lambda i: (0, 0)),    # b2
            ],
            out_specs=pl.BlockSpec((tm, N), lambda i: (i, 0)),
        ),
        compiler_params=pltpu.CompilerParams(
            dimension_semantics=("parallel",),             # independent row tiles
            vmem_limit_bytes=vmem_limit,
        ),
        cost_estimate=cost,
    )(x_in, w1, b1_2d, w2, b2_2d)

    return out[:B] if Bp != B else out


def _reference(x, w1, b1, w2, b2):
    def inorm(h):
        m = jnp.mean(h, axis=-1, keepdims=True)
        v = jnp.mean((h - m) ** 2, axis=-1, keepdims=True)
        return (h - m) / jnp.sqrt(v + _EPS)

    h = x @ w1.T + b1
    h = jnp.maximum(inorm(h), 0.0)
    h = h @ w2.T + b2
    return inorm(h) + x


if __name__ == "__main__":
    key = jax.random.PRNGKey(0)
    batch, num_neurons = 8, 32

    kx, kw1, kb1, kw2, kb2 = jax.random.split(key, 5)
    x = jax.random.normal(kx, (batch, num_neurons), dtype=jnp.float32)
    # Deterministic init mimicking nn.Linear: U(-1/sqrt(N), 1/sqrt(N))
    bound = 1.0 / (num_neurons ** 0.5)
    w1 = jax.random.uniform(kw1, (num_neurons, num_neurons),
                            minval=-bound, maxval=bound, dtype=jnp.float32)
    b1 = jax.random.uniform(kb1, (num_neurons,),
                            minval=-bound, maxval=bound, dtype=jnp.float32)
    w2 = jax.random.uniform(kw2, (num_neurons, num_neurons),
                            minval=-bound, maxval=bound, dtype=jnp.float32)
    b2 = jax.random.uniform(kb2, (num_neurons,),
                            minval=-bound, maxval=bound, dtype=jnp.float32)

    out = ins_res_block(x, w1, b1, w2, b2)
    jax.block_until_ready(out)

    ref = _reference(x, w1, b1, w2, b2)
    assert out.shape == (batch, num_neurons)
    assert jnp.allclose(out, ref, atol=1e-4, rtol=1e-4), float(jnp.max(jnp.abs(out - ref)))

    print("KERNEL_OK")
</pallas_src>

<mosaic_0001>
module attributes {stable_mosaic.version = 11 : i64} {
  func.func @ins_res_block_kernel(%arg0: i32, %arg1: memref<8x32xf32, #tpu.memory_space<vmem>>, %arg2: memref<32x32xf32, #tpu.memory_space<vmem>>, %arg3: memref<1x32xf32, #tpu.memory_space<vmem>>, %arg4: memref<32x32xf32, #tpu.memory_space<vmem>>, %arg5: memref<1x32xf32, #tpu.memory_space<vmem>>, %arg6: memref<8x32xf32, #tpu.memory_space<vmem>>) attributes {dimension_semantics = [#tpu.dimension_semantics<parallel>], iteration_bounds = array<i64: 1>, scalar_prefetch = 0 : i64, scratch_operands = 0 : i64, tpu.core_type = #tpu.core_type<tc>, window_params = [{transform_indices = @transform_0, window_bounds = array<i64: 8, 32>}, {pipeline_mode = #tpu.pipeline_mode<synchronous>, transform_indices = @transform_1, window_bounds = array<i64: 32, 32>}, {pipeline_mode = #tpu.pipeline_mode<synchronous>, transform_indices = @transform_2, window_bounds = array<i64: 1, 32>}, {pipeline_mode = #tpu.pipeline_mode<synchronous>, transform_indices = @transform_3, window_bounds = array<i64: 32, 32>}, {pipeline_mode = #tpu.pipeline_mode<synchronous>, transform_indices = @transform_4, window_bounds = array<i64: 1, 32>}, {transform_indices = @transform_5, window_bounds = array<i64: 8, 32>}]} {
    %c0 = arith.constant 0 : index
    %c0_0 = arith.constant 0 : index
    %0 = vector.load %arg1[%c0, %c0_0] : memref<8x32xf32, #tpu.memory_space<vmem>>, vector<8x32xf32>
    %c0_1 = arith.constant 0 : index
    %c0_2 = arith.constant 0 : index
    %1 = vector.load %arg2[%c0_1, %c0_2] : memref<32x32xf32, #tpu.memory_space<vmem>>, vector<32x32xf32>
    %cst = arith.constant dense<0.000000e+00> : vector<8x32xf32>
    %2 = tpu.matmul %0, %1, %cst {dimension_numbers = #tpu.dot_dimension_numbers<[1], [1], [0], [0], [0, 0, 1, 0], [], []>} : vector<8x32xf32>, vector<32x32xf32>, vector<8x32xf32> -> vector<8x32xf32>
    %c0_3 = arith.constant 0 : index
    %c0_4 = arith.constant 0 : index
    %3 = vector.load %arg3[%c0_3, %c0_4] : memref<1x32xf32, #tpu.memory_space<vmem>>, vector<1x32xf32>
    %4 = vector.broadcast %3 : vector<1x32xf32> to vector<8x32xf32>
    %5 = arith.addf %2, %4 : vector<8x32xf32>
    %cst_5 = arith.constant dense<0.000000e+00> : vector<8xf32>
    %6 = vector.multi_reduction <add>, %5, %cst_5 [1] : vector<8x32xf32> to vector<8xf32>
    %7 = vector.shape_cast %6 : vector<8xf32> to vector<8x1xf32>
    %cst_6 = arith.constant 3.200000e+01 : f32
    %8 = vector.broadcast %cst_6 : f32 to vector<8x1xf32>
    %9 = arith.divf %7, %8 : vector<8x1xf32>
    %10 = vector.broadcast %9 : vector<8x1xf32> to vector<8x32xf32>
    %11 = arith.subf %5, %10 : vector<8x32xf32>
    %12 = arith.mulf %11, %11 : vector<8x32xf32>
    %cst_7 = arith.constant dense<0.000000e+00> : vector<8xf32>
    %13 = vector.multi_reduction <add>, %12, %cst_7 [1] : vector<8x32xf32> to vector<8xf32>
    %14 = vector.shape_cast %13 : vector<8xf32> to vector<8x1xf32>
    %cst_8 = arith.constant 3.200000e+01 : f32
    %15 = vector.broadcast %cst_8 : f32 to vector<8x1xf32>
    %16 = arith.divf %14, %15 : vector<8x1xf32>
    %cst_9 = arith.constant 9.99999974E-6 : f32
    %17 = vector.broadcast %cst_9 : f32 to vector<8x1xf32>
    %18 = arith.addf %16, %17 : vector<8x1xf32>
    %19 = math.rsqrt %18 : vector<8x1xf32>
    %20 = vector.broadcast %19 : vector<8x1xf32> to vector<8x32xf32>
    %21 = arith.mulf %11, %20 : vector<8x32xf32>
    %cst_10 = arith.constant 0.000000e+00 : f32
    %22 = vector.broadcast %cst_10 : f32 to vector<8x32xf32>
    %23 = arith.maximumf %21, %22 : vector<8x32xf32>
    %c0_11 = arith.constant 0 : index
    %c0_12 = arith.constant 0 : index
    %24 = vector.load %arg4[%c0_11, %c0_12] : memref<32x32xf32, #tpu.memory_space<vmem>>, vector<32x32xf32>
    %cst_13 = arith.constant dense<0.000000e+00> : vector<8x32xf32>
    %25 = tpu.matmul %23, %24, %cst_13 {dimension_numbers = #tpu.dot_dimension_numbers<[1], [1], [0], [0], [0, 0, 1, 0], [], []>} : vector<8x32xf32>, vector<32x32xf32>, vector<8x32xf32> -> vector<8x32xf32>
    %c0_14 = arith.constant 0 : index
    %c0_15 = arith.constant 0 : index
    %26 = vector.load %arg5[%c0_14, %c0_15] : memref<1x32xf32, #tpu.memory_space<vmem>>, vector<1x32xf32>
    %27 = vector.broadcast %26 : vector<1x32xf32> to vector<8x32xf32>
    %28 = arith.addf %25, %27 : vector<8x32xf32>
    %cst_16 = arith.constant dense<0.000000e+00> : vector<8xf32>
    %29 = vector.multi_reduction <add>, %28, %cst_16 [1] : vector<8x32xf32> to vector<8xf32>
    %30 = vector.shape_cast %29 : vector<8xf32> to vector<8x1xf32>
    %cst_17 = arith.constant 3.200000e+01 : f32
    %31 = vector.broadcast %cst_17 : f32 to vector<8x1xf32>
    %32 = arith.divf %30, %31 : vector<8x1xf32>
    %33 = vector.broadcast %32 : vector<8x1xf32> to vector<8x32xf32>
    %34 = arith.subf %28, %33 : vector<8x32xf32>
    %35 = arith.mulf %34, %34 : vector<8x32xf32>
    %cst_18 = arith.constant dense<0.000000e+00> : vector<8xf32>
    %36 = vector.multi_reduction <add>, %35, %cst_18 [1] : vector<8x32xf32> to vector<8xf32>
    %37 = vector.shape_cast %36 : vector<8xf32> to vector<8x1xf32>
    %cst_19 = arith.constant 3.200000e+01 : f32
    %38 = vector.broadcast %cst_19 : f32 to vector<8x1xf32>
    %39 = arith.divf %37, %38 : vector<8x1xf32>
    %cst_20 = arith.constant 9.99999974E-6 : f32
    %40 = vector.broadcast %cst_20 : f32 to vector<8x1xf32>
    %41 = arith.addf %39, %40 : vector<8x1xf32>
    %42 = math.rsqrt %41 : vector<8x1xf32>
    %43 = vector.broadcast %42 : vector<8x1xf32> to vector<8x32xf32>
    %44 = arith.mulf %34, %43 : vector<8x32xf32>
    %45 = arith.addf %44, %0 : vector<8x32xf32>
    %c0_21 = arith.constant 0 : index
    %c0_22 = arith.constant 0 : index
    %46 = vector.load %arg6[%c0_21, %c0_22] : memref<8x32xf32, #tpu.memory_space<vmem>>, vector<8x32xf32>
    tpu.vector_store %arg6[%c0_21, %c0_22], %45 {strides = array<i32>} : memref<8x32xf32, #tpu.memory_space<vmem>>, vector<8x32xf32>,
    return
  }
  func.func @transform_0(%arg0: i32) -> (i32, i32) {
    %c0_i32 = arith.constant 0 : i32
    %c0_i32_0 = arith.constant 0 : i32
    return %arg0, %c0_i32 : i32, i32
  }
  func.func @transform_1(%arg0: i32) -> (i32, i32) {
    %c0_i32 = arith.constant 0 : i32
    %c0_i32_0 = arith.constant 0 : i32
    %c0_i32_1 = arith.constant 0 : i32
    return %c0_i32, %c0_i32_0 : i32, i32
  }
  func.func @transform_2(%arg0: i32) -> (i32, i32) {
    %c0_i32 = arith.constant 0 : i32
    %c0_i32_0 = arith.constant 0 : i32
    %c0_i32_1 = arith.constant 0 : i32
    return %c0_i32, %c0_i32_0 : i32, i32
  }
  func.func @transform_3(%arg0: i32) -> (i32, i32) {
    %c0_i32 = arith.constant 0 : i32
    %c0_i32_0 = arith.constant 0 : i32
    %c0_i32_1 = arith.constant 0 : i32
    return %c0_i32, %c0_i32_0 : i32, i32
  }
  func.func @transform_4(%arg0: i32) -> (i32, i32) {
    %c0_i32 = arith.constant 0 : i32
    %c0_i32_0 = arith.constant 0 : i32
    %c0_i32_1 = arith.constant 0 : i32
    return %c0_i32, %c0_i32_0 : i32, i32
  }
  func.func @transform_5(%arg0: i32) -> (i32, i32) {
    %c0_i32 = arith.constant 0 : i32
    %c0_i32_0 = arith.constant 0 : i32
    return %arg0, %c0_i32 : i32, i32
  }
}

</mosaic_0001>

<llo_original>
// kernel: tpu_custom_call.1
$region0: #{tpu_custom_call.1}
  #allocation0 [shape = 'u32[]', space=smem, size = 0x4, offset = 0x4, fixed_abs, tag = 'smem constant byte address 0x4 - core index']
  #allocation1 [shape = 'u32[144,128]{1,0:T(1,128)}', space=vmem, size = 0x12000, scoped, tag = 'internal scratch']
  %s0 = inlined_call_operand.hbm [shape: f32[8,32], index: 0, kind: input, shape index: {}]
  %s1 = inlined_call_operand.hbm [shape: f32[32,32], index: 1, kind: input, shape index: {}]
  %s2 = inlined_call_operand.vmem [shape: f32[1,32], index: 2, kind: input, shape index: {}]
  %s3 = inlined_call_operand.hbm [shape: f32[32,32], index: 3, kind: input, shape index: {}]
  %s4 = inlined_call_operand.vmem [shape: f32[1,32], index: 4, kind: input, shape index: {}]
  %s5 = inlined_call_operand.hbm [shape: f32[8,32], index: 5, kind: output, shape index: {}]
  %s6 = sld [smem:[#allocation0]]
  $region42: #{tpu_custom_call.1} parent=0
    _
  %s8 = ssub.s32 1, %s6
  %s9 = scalar_select 0, %s8, %s6
  $region1: #{tpu_custom_call.1} parent=0
    #allocation2 [shape = 'u8[4096]{0}', space=vmem, size = 0x1000, scoped, tag = 'input window, operand 0, single buffered']
    #allocation3 [shape = 's32[1]{0}', space=sflag, size = 0x4, scoped, tag = 'scoped memory for tpu_custom_call.1']
    #allocation4 [shape = 's32[1]{0}', space=sflag, size = 0x4, scoped, tag = 'scoped memory for tpu_custom_call.1']
    #allocation5 [shape = 'u8[16384]{0}', space=vmem, size = 0x4000, scoped, tag = 'input window, operand 1, single buffered']
    #allocation6 [shape = 's32[1]{0}', space=sflag, size = 0x4, scoped, tag = 'scoped memory for tpu_custom_call.1']
    #allocation7 [shape = 'u8[16384]{0}', space=vmem, size = 0x4000, scoped, tag = 'input window, operand 3, single buffered']
    #allocation8 [shape = 'u8[4096]{0}', space=vmem, size = 0x1000, scoped, tag = 'output window, operand 0, single buffered']
    %10 = vsyncpa [#allocation3], 0
    %11 = vsyncpa [#allocation6], 0
    %12 = vsyncpa [#allocation4], 0
    // Predicated region
    $region2: #{tpu_custom_call.1} parent=1 // pred_check
      _
    $region3: #{tpu_custom_call.1} parent=1 // pred_check_branch
      %14 = sbr.rel (0) target = $region5
    $region4: #{tpu_custom_call.1} parent=1 // pred_region
      %s16 = ssub.s32 128, 128
      %17 = vsyncadd [#allocation3], %s16
      %s19 = sshll.u32 [#allocation2], 4
      %s20 = int_to_ptr.vmem [resolvable:$true] %s19
      %22 = dma.hbm_to_vmem [thread:$0]  %s0, 128, %s20, [#allocation3]
    $region5: #{tpu_custom_call.1} parent=1 // pred_fallthru
      _
    // Predicated region
    $region6: #{tpu_custom_call.1} parent=1 // pred_check
      _
    $region7: #{tpu_custom_call.1} parent=1 // pred_check_branch
      %24 = sbr.rel (0) target = $region9
    $region8: #{tpu_custom_call.1} parent=1 // pred_region
      %s26 = ssub.s32 512, 512
      %27 = vsyncadd [#allocation6], %s26
      %s28 = sshll.u32 [#allocation5], 4
      %s29 = int_to_ptr.vmem [resolvable:$true] %s28
      %34 = dma.hbm_to_vmem [thread:$0]  %s1, 512, %s29, [#allocation6], 128, 128, 8
    $region9: #{tpu_custom_call.1} parent=1 // pred_fallthru
      _
    // Predicated region
    $region10: #{tpu_custom_call.1} parent=1 // pred_check
      _
    $region11: #{tpu_custom_call.1} parent=1 // pred_check_branch
      %36 = sbr.rel (0) target = $region13
    $region12: #{tpu_custom_call.1} parent=1 // pred_region
      _
    $region13: #{tpu_custom_call.1} parent=1 // pred_fallthru
      _
    // Predicated region
    $region14: #{tpu_custom_call.1} parent=1 // pred_check
      _
    $region15: #{tpu_custom_call.1} parent=1 // pred_check_branch
      %38 = sbr.rel (0) target = $region17
    $region16: #{tpu_custom_call.1} parent=1 // pred_region
      %s40 = ssub.s32 512, 512
      %41 = vsyncadd [#allocation6], %s40
      %s42 = sshll.u32 [#allocation7], 4
      %s43 = int_to_ptr.vmem [resolvable:$true] %s42
      %48 = dma.hbm_to_vmem [thread:$0]  %s3, 512, %s43, [#allocation6], 128, 128, 8
    $region17: #{tpu_custom_call.1} parent=1 // pred_fallthru
      _
    // Predicated region
    $region18: #{tpu_custom_call.1} parent=1 // pred_check
      _
    $region19: #{tpu_custom_call.1} parent=1 // pred_check_branch
      %50 = sbr.rel (0) target = $region21
    $region20: #{tpu_custom_call.1} parent=1 // pred_region
      _
    $region21: #{tpu_custom_call.1} parent=1 // pred_fallthru
      _
    // Predicated region
    $region22: #{tpu_custom_call.1} parent=1 // pred_check
      _
    $region23: #{tpu_custom_call.1} parent=1 // pred_check_branch
      %52 = sbr.rel (0) target = $region25
    $region24: #{tpu_custom_call.1} parent=1 // pred_region
      %53 = dma.done [#allocation3], 128
    $region25: #{tpu_custom_call.1} parent=1 // pred_fallthru
      _
    // Predicated region
    $region26: #{tpu_custom_call.1} parent=1 // pred_check
      _
    $region27: #{tpu_custom_call.1} parent=1 // pred_check_branch
      %55 = sbr.rel (0) target = $region29
    $region28: #{tpu_custom_call.1} parent=1 // pred_region
      %56 = dma.done [#allocation6], 512
    $region29: #{tpu_custom_call.1} parent=1 // pred_fallthru
      _
    // Predicated region
    $region30: #{tpu_custom_call.1} parent=1 // pred_check
      _
    $region31: #{tpu_custom_call.1} parent=1 // pred_check_branch
      %58 = sbr.rel (0) target = $region33
    $region32: #{tpu_custom_call.1} parent=1 // pred_region
      %59 = dma.done [#allocation6], 512
    $region33: #{tpu_custom_call.1} parent=1 // pred_fallthru
      _
    %v60 = vld [vmem:[#allocation2] sm:$0xff]
    %v61 = vld [vmem:[#allocation5] sm:$0xff]
    %v62 = vld [vmem:[#allocation5 + $0x8] sm:$0xff]
    %v63 = vld [vmem:[#allocation5 + $0x10] sm:$0xff]
    %v64 = vld [vmem:[#allocation5 + $0x18] sm:$0xff]
    %v65 = vld [vmem:[%s2] sm:$0x1]
    %v67 = vlaneseq
    %v68 = vshrl.u32 %v67, 7
    %v69 = vsub.s32 0, %v68
    %v70 = vrot.slane %v65, %v69
    %vm72 = vcmask 261120
    %v74 = vsel %vm72, %v60, 0
    %v77 = vsel %vm72, %v61, 0
    %v80 = vsel %vm72, %v62, 0
    %v83 = vsel %vm72, %v63, 0
    %v86 = vsel %vm72, %v64, 0
    %88 = vmatprep.subr.mxu0 0.0
    %89 = vmatpush1.xpose.msra.mxu0 %v77
    %90 = vmatprep.subr.mxu0 0.0
    %91 = vmatpush1.xpose.msra.mxu0 %v80
    %92 = vmatprep.subr.mxu0 0.0
    %93 = vmatpush1.xpose.msra.mxu0 %v83
    %94 = vmatprep.subr.mxu0 0.0
    %95 = vmatpush1.xpose.msra.mxu0 %v86
    %96 = vmatprep.subr.mxu0 0.0
    %97 = vmatpush1.xpose.msra.mxu0 0.0
    %98 = vmatprep.subr.mxu0 0.0
    %99 = vmatpush1.xpose.msra.mxu0 0.0
    %100 = vmatprep.subr.mxu0 0.0
    %101 = vmatpush1.xpose.msra.mxu0 0.0
    %102 = vmatprep.subr.mxu0 0.0
    %103 = vmatpush1.xpose.msra.mxu0 0.0
    %104 = vmatprep.subr.mxu0 0.0
    %105 = vmatpush1.xpose.msra.mxu0 0.0
    %106 = vmatprep.subr.mxu0 0.0
    %107 = vmatpush1.xpose.msra.mxu0 0.0
    %108 = vmatprep.subr.mxu0 0.0
    %109 = vmatpush1.xpose.msra.mxu0 0.0
    %110 = vmatprep.subr.mxu0 0.0
    %111 = vmatpush1.xpose.msra.mxu0 0.0
    %112 = vmatprep.subr.mxu0 0.0
    %113 = vmatpush1.xpose.msra.mxu0 0.0
    %114 = vmatprep.subr.mxu0 0.0
    %115 = vmatpush1.xpose.msra.mxu0 0.0
    %116 = vmatprep.subr.mxu0 0.0
    %117 = vmatpush1.xpose.msra.mxu0 0.0
    %118 = vmatprep.subr.mxu0 0.0
    %119 = vmatpush1.xpose.msra.mxu0 0.0
    %120 = vmatprep.subr.mxu0 0.0
    %121 = vmatpush1.xpose.msra.mxu0 0.0
    %122 = vmatprep.subr.mxu0 0.0
    %123 = vmatpush1.xpose.msra.mxu0 0.0
    %124 = vmatprep.subr.mxu0 0.0
    %125 = vmatpush1.xpose.msra.mxu0 0.0
    %126 = vmatprep.subr.mxu0 0.0
    %127 = vmatpush1.xpose.msra.mxu0 0.0
    %128 = vmatprep.subr.mxu0 0.0
    %129 = vmatpush1.xpose.msra.mxu0 0.0
    %130 = vmatprep.subr.mxu0 0.0
    %131 = vmatpush1.xpose.msra.mxu0 0.0
    %132 = vmatprep.subr.mxu0 0.0
    %133 = vmatpush1.xpose.msra.mxu0 0.0
    %134 = vmatprep.subr.mxu0 0.0
    %135 = vmatpush1.xpose.msra.mxu0 0.0
    %136 = vmatprep.subr.mxu0 0.0
    %137 = vmatpush1.xpose.msra.mxu0 0.0
    %138 = vmatprep.subr.mxu0 0.0
    %139 = vmatpush1.xpose.msra.mxu0 0.0
    %140 = vmatprep.subr.mxu0 0.0
    %141 = vmatpush1.xpose.msra.mxu0 0.0
    %142 = vmatprep.subr.mxu0 0.0
    %143 = vmatpush1.xpose.msra.mxu0 0.0
    %144 = vmatprep.subr.mxu0 0.0
    %145 = vmatpush1.xpose.msra.mxu0 0.0
    %146 = vmatprep.subr.mxu0 0.0
    %147 = vmatpush1.xpose.msra.mxu0 0.0
    %148 = vmatprep.subr.mxu0 0.0
    %149 = vmatpush1.xpose.msra.mxu0 0.0
    %150 = vmatprep.subr.mxu0 0.0
    %151 = vmatpush1.xpose.msra.mxu0 0.0
    %152 = vmatprep.mubr.f32.mxu0 0.0
    %153 = vmatmul.mubr.f32.gmra.mrb[0].mxu0 %v74
    %v154 = vpop.f32.mrb[0].mxu0
    %v155 = vadd.f32 %v70, %v154
    %v156 = vpop.f32.mrb[0].mxu0
    %157 = vdwg.mxu0
    %v158 = vsel %vm72, %v155, 0.0
    %159 = vadd.xlane.f32.xlu0 %v158
    %v160 = vpop.xlane.xlu0 %159
    %v161 = vrcp.pop 32.0
    %v162 = vmul.f32 %v160, %v161
    %v163 = vsub.f32 %v155, %v162
    %v164 = vmul.f32 %v163, %v163
    %v165 = vsel %vm72, %v164, 0.0
    %166 = vadd.xlane.f32.xlu0 %v165
    %v167 = vpop.xlane.xlu0 %166
    %v168 = vmul.f32 %v167, %v161
    %v169 = vadd.f32 %v168, 1e-05
    %v170 = vrsqrt.pop %v169
    %v171 = vmul.f32 %v163, %v170
    %v172 = vmax.f32 %v171, 0.0
    %v173 = vld [vmem:[#allocation7] sm:$0xff]
    %v174 = vld [vmem:[#allocation7 + $0x8] sm:$0xff]
    %v175 = vld [vmem:[#allocation7 + $0x10] sm:$0xff]
    %v176 = vld [vmem:[#allocation7 + $0x18] sm:$0xff]
    %v177 = vld [vmem:[%s4] sm:$0x1]
    %v179 = vlaneseq
    %v180 = vshrl.u32 %v179, 7
    %v181 = vsub.s32 0, %v180
    %v182 = vrot.slane %v177, %v181
    %v185 = vsel %vm72, %v172, 0
    %v188 = vsel %vm72, %v173, 0
    %v191 = vsel %vm72, %v174, 0
    %v194 = vsel %vm72, %v175, 0
    %v197 = vsel %vm72, %v176, 0
    %199 = vmatprep.subr.mxu0 0.0
    %200 = vmatpush1.xpose.msra.mxu0 %v188
    %201 = vmatprep.subr.mxu0 0.0
    %202 = vmatpush1.xpose.msra.mxu0 %v191
    %203 = vmatprep.subr.mxu0 0.0
    %204 = vmatpush1.xpose.msra.mxu0 %v194
    %205 = vmatprep.subr.mxu0 0.0
    %206 = vmatpush1.xpose.msra.mxu0 %v197
    %207 = vmatprep.subr.mxu0 0.0
    %208 = vmatpush1.xpose.msra.mxu0 0.0
    %209 = vmatprep.subr.mxu0 0.0
    %210 = vmatpush1.xpose.msra.mxu0 0.0
    %211 = vmatprep.subr.mxu0 0.0
    %212 = vmatpush1.xpose.msra.mxu0 0.0
    %213 = vmatprep.subr.mxu0 0.0
    %214 = vmatpush1.xpose.msra.mxu0 0.0
    %215 = vmatprep.subr.mxu0 0.0
    %216 = vmatpush1.xpose.msra.mxu0 0.0
    %217 = vmatprep.subr.mxu0 0.0
    %218 = vmatpush1.xpose.msra.mxu0 0.0
    %219 = vmatprep.subr.mxu0 0.0
    %220 = vmatpush1.xpose.msra.mxu0 0.0
    %221 = vmatprep.subr.mxu0 0.0
    %222 = vmatpush1.xpose.msra.mxu0 0.0
    %223 = vmatprep.subr.mxu0 0.0
    %224 = vmatpush1.xpose.msra.mxu0 0.0
    %225 = vmatprep.subr.mxu0 0.0
    %226 = vmatpush1.xpose.msra.mxu0 0.0
    %227 = vmatprep.subr.mxu0 0.0
    %228 = vmatpush1.xpose.msra.mxu0 0.0
    %229 = vmatprep.subr.mxu0 0.0
    %230 = vmatpush1.xpose.msra.mxu0 0.0
    %231 = vmatprep.subr.mxu0 0.0
    %232 = vmatpush1.xpose.msra.mxu0 0.0
    %233 = vmatprep.subr.mxu0 0.0
    %234 = vmatpush1.xpose.msra.mxu0 0.0
    %235 = vmatprep.subr.mxu0 0.0
    %236 = vmatpush1.xpose.msra.mxu0 0.0
    %237 = vmatprep.subr.mxu0 0.0
    %238 = vmatpush1.xpose.msra.mxu0 0.0
    %239 = vmatprep.subr.mxu0 0.0
    %240 = vmatpush1.xpose.msra.mxu0 0.0
    %241 = vmatprep.subr.mxu0 0.0
    %242 = vmatpush1.xpose.msra.mxu0 0.0
    %243 = vmatprep.subr.mxu0 0.0
    %244 = vmatpush1.xpose.msra.mxu0 0.0
    %245 = vmatprep.subr.mxu0 0.0
    %246 = vmatpush1.xpose.msra.mxu0 0.0
    %247 = vmatprep.subr.mxu0 0.0
    %248 = vmatpush1.xpose.msra.mxu0 0.0
    %249 = vmatprep.subr.mxu0 0.0
    %250 = vmatpush1.xpose.msra.mxu0 0.0
    %251 = vmatprep.subr.mxu0 0.0
    %252 = vmatpush1.xpose.msra.mxu0 0.0
    %253 = vmatprep.subr.mxu0 0.0
    %254 = vmatpush1.xpose.msra.mxu0 0.0
    %255 = vmatprep.subr.mxu0 0.0
    %256 = vmatpush1.xpose.msra.mxu0 0.0
    %257 = vmatprep.subr.mxu0 0.0
    %258 = vmatpush1.xpose.msra.mxu0 0.0
    %259 = vmatprep.subr.mxu0 0.0
    %260 = vmatpush1.xpose.msra.mxu0 0.0
    %261 = vmatprep.subr.mxu0 0.0
    %262 = vmatpush1.xpose.msra.mxu0 0.0
    %263 = vmatprep.mubr.f32.mxu0 0.0
    %264 = vmatmul.mubr.f32.gmra.mrb[0].mxu0 %v185
    %v265 = vpop.f32.mrb[0].mxu0
    %v266 = vadd.f32 %v182, %v265
    %v267 = vpop.f32.mrb[0].mxu0
    %268 = vdwg.mxu0
    %v269 = vsel %vm72, %v266, 0.0
    %270 = vadd.xlane.f32.xlu0 %v269
    %v271 = vpop.xlane.xlu0 %270
    %v272 = vmul.f32 %v271, %v161
    %v273 = vsub.f32 %v266, %v272
    %v274 = vmul.f32 %v273, %v273
    %v275 = vsel %vm72, %v274, 0.0
    %276 = vadd.xlane.f32.xlu0 %v275
    %v277 = vpop.xlane.xlu0 %276
    %v278 = vmul.f32 %v277, %v161
    %v279 = vadd.f32 %v278, 1e-05
    %v280 = vrsqrt.pop %v279
    %v281 = vmul.f32 %v273, %v280
    %v282 = vadd.f32 %v281, %v60
    %283 = vst.msk [vmem:[#allocation8] sm:$0xff] %vm72, %v282
    // Predicated region
    $region34: #{tpu_custom_call.1} parent=1 // pred_check
      _
    $region35: #{tpu_custom_call.1} parent=1 // pred_check_branch
      %285 = sbr.rel (0) target = $region37
    $region36: #{tpu_custom_call.1} parent=1 // pred_region
      %s287 = ssub.s32 128, 128
      %288 = vsyncadd [#allocation4], %s287
      %s290 = sshll.u32 [#allocation8], 4
      %s291 = int_to_ptr.vmem [resolvable:$true] %s290
      %293 = dma.vmem_to_hbm [thread:$0]  %s291, 128, %s5, [#allocation4]
    $region37: #{tpu_custom_call.1} parent=1 // pred_fallthru
      _
    // Predicated region
    $region38: #{tpu_custom_call.1} parent=1 // pred_check
      _
    $region39: #{tpu_custom_call.1} parent=1 // pred_check_branch
      %295 = sbr.rel (0) target = $region41
    $region40: #{tpu_custom_call.1} parent=1 // pred_region
      %296 = dma.done [#allocation4], 128
    $region41: #{tpu_custom_call.1} parent=1 // pred_fallthru
      _
    %297 = vsyncpa [#allocation3], 1
    %298 = vsyncpa [#allocation6], 1
    %299 = vsyncpa [#allocation4], 1

</llo_original>
